<compile_context>
chip_gen: v7x
topology: tpu7x:2x2x1
jax: 0.10.0
libtpu: 0.0.40
codegen_flags: <defaults>
</compile_context>

<pallas_src>
import jax
import jax.numpy as jnp
from jax.experimental import pallas as pl
from jax.experimental.pallas import tpu as pltpu


INPUT_SIZE = 6
HIDDEN1 = 128
HIDDEN2 = 64
NUM_CLASSES = 26


# ----------------------------- kernel body ---------------------------------


def fcnn_kernel(x_ref, w1_ref, b1_ref, w2_ref, b2_ref, w3_ref, b3_ref, o_ref):
    # x_ref : (INPUT_SIZE, tb)  compute dtype     wK_ref : (out_k, in_k)
    # bK_ref: (out_k, 1) f32                      o_ref  : (NUM_CLASSES, tb)
    cdt = w2_ref.dtype  # compute dtype (bf16 or f32)

    x = x_ref[...]

    # fc1 + ReLU  (f32 accumulate / bias / max, then narrow the stored value)
    h1 = jnp.dot(w1_ref[...], x, preferred_element_type=jnp.float32) + b1_ref[...]
    h1 = jnp.maximum(h1, 0.0).astype(cdt)                 # (128, tb) narrowed

    # dropout(p=0.3) -> identity in eval mode

    # fc2 + ReLU
    h2 = jnp.dot(w2_ref[...], h1, preferred_element_type=jnp.float32) + b2_ref[...]
    h2 = jnp.maximum(h2, 0.0).astype(cdt)                 # (64, tb) narrowed

    # fc3 (logits)
    out = jnp.dot(w3_ref[...], h2, preferred_element_type=jnp.float32) + b3_ref[...]
    o_ref[...] = out.astype(o_ref.dtype)                  # (26, tb)


# --------------------------- tile-size selection ----------------------------


def _round_up(n, m):
    return m * ((n + m - 1) // m)


def _vmem_capacity_bytes():
    """Physical VMEM per TensorCore; conservative fallback = 64 MiB (v7x)."""
    try:
        v = getattr(pltpu.get_tpu_info(), "vmem_capacity_bytes", None)
        if v:
            return int(v)
    except Exception:
        pass
    return 64 * 1024 * 1024


def _num_tensorcores():
    """Best-effort TensorCore count (v7x has 2); fallback = 1 (v5e/v6e)."""
    try:
        info = pltpu.get_tpu_info()
        for attr in ("num_tensorcores", "tensorcores_per_chip", "num_cores"):
            v = getattr(info, attr, None)
            if v:
                return int(v)
    except Exception:
        pass
    return 1


def _per_lane_vmem_bytes(compute_itemsize, out_itemsize):
    """Approx VMEM bytes needed per batch lane at a given tile size."""
    return (
        2 * INPUT_SIZE * compute_itemsize      # x tile, double-buffered
        + 2 * NUM_CLASSES * out_itemsize       # out tile, double-buffered
        + HIDDEN1 * (4 + compute_itemsize)     # h1 f32 acc + narrowed copy
        + HIDDEN2 * (4 + compute_itemsize)     # h2 f32 acc + narrowed copy
        + NUM_CLASSES * 4                      # f32 logits before downcast
    )


def _pick_tile_b(batch, max_tile_b, compute_itemsize, out_itemsize):
    """Largest 128-multiple tile that fits the VMEM budget for this chip,
    without over-padding small batches; on multi-TC chips keep >= num_cores
    grid steps so the 'parallel' batch axis actually shards across cores."""
    per_lane = _per_lane_vmem_bytes(compute_itemsize, out_itemsize)
    budget = int(0.4 * _vmem_capacity_bytes())            # leave ample headroom
    vmem_cap = max(128, (budget // per_lane) // 128 * 128)

    tile = max(128, min(max_tile_b, vmem_cap))
    tile = min(tile, _round_up(max(1, batch), 128))        # no over-padding

    cores = _num_tensorcores()
    if cores > 1:
        per_core = _round_up(max(1, -(-batch // cores)), 128)
        tile = min(tile, max(128, per_core))

    assert tile % 128 == 0
    return tile


# ------------------------------ host wrappers -------------------------------


def prepare_params(params, *, use_bf16=True):
    """Hoist the weight/bias casts out of the hot path (call once, reuse)."""
    w1, b1, w2, b2, w3, b3 = params
    cdt = jnp.bfloat16 if use_bf16 else jnp.float32
    return (w1.astype(cdt), b1.astype(jnp.float32),
            w2.astype(cdt), b2.astype(jnp.float32),
            w3.astype(cdt), b3.astype(jnp.float32))


def fcnn_forward(x, params, *, max_tile_b=8192, use_bf16=True, out_dtype=None,
                 feature_major_out=False):
    """x: [B, INPUT_SIZE] float32.

    Returns [B, NUM_CLASSES] (or [NUM_CLASSES, B] if feature_major_out=True).
    params = (w1, b1, w2, b2, w3, b3); wK PyTorch-native [out, in], bK [out, 1].
    out_dtype defaults to bf16 when use_bf16 (pass jnp.float32 for PyTorch-exact
    output dtype). use_bf16=False restores exact f32 operand math.
    """
    w1, b1, w2, b2, w3, b3 = params
    B = x.shape[0]

    compute_dtype = jnp.bfloat16 if use_bf16 else jnp.float32
    if out_dtype is None:
        out_dtype = jnp.bfloat16 if use_bf16 else jnp.float32
    c_isz = jnp.dtype(compute_dtype).itemsize
    o_isz = jnp.dtype(out_dtype).itemsize

    tile_b = _pick_tile_b(B, max_tile_b, c_isz, o_isz)
    num_tiles = pl.cdiv(B, tile_b)
    b_pad = num_tiles * tile_b

    # Layout plumbing: feature-major x, pad batch to the tile (fuses under jit).
    x_t = x.T                                              # (INPUT_SIZE, B)
    if b_pad != B:
        x_t = jnp.pad(x_t, ((0, 0), (0, b_pad - B)))
    x_t = x_t.astype(compute_dtype)

    # No-op casts if params were already prepared via prepare_params().
    w1c, w2c, w3c = (w.astype(compute_dtype) for w in (w1, w2, w3))
    b1c, b2c, b3c = (b.astype(jnp.float32) for b in (b1, b2, b3))

    const_spec = lambda shape: pl.BlockSpec(shape, lambda i: (0, 0))

    weight_bytes = sum(int(a.size) * a.dtype.itemsize
                       for a in (w1c, b1c, w2c, b2c, w3c, b3c))
    flops = 2 * b_pad * (INPUT_SIZE * HIDDEN1
                         + HIDDEN1 * HIDDEN2
                         + HIDDEN2 * NUM_CLASSES)
    bytes_accessed = (x_t.size * x_t.dtype.itemsize
                      + weight_bytes
                      + b_pad * NUM_CLASSES * o_isz)

    # Explicit VMEM limit so large tiles don't hit the low default scoped
    # limits (v5e: 16 MiB, v6e/v7x: 32 MiB); clamp to physical capacity.
    est_vmem = (_per_lane_vmem_bytes(c_isz, o_isz) * tile_b
                + 2 * weight_bytes + (4 << 20))
    vmem_limit = int(min(_vmem_capacity_bytes(), max(32 << 20, 2 * est_vmem)))

    out_t = pl.pallas_call(
        fcnn_kernel,
        out_shape=jax.ShapeDtypeStruct((NUM_CLASSES, b_pad), out_dtype),
        grid_spec=pltpu.PrefetchScalarGridSpec(
            num_scalar_prefetch=0,
            grid=(num_tiles,),
            in_specs=[
                pl.BlockSpec((INPUT_SIZE, tile_b), lambda i: (0, i)),   # x tile
                const_spec((HIDDEN1, INPUT_SIZE)),                      # W1
                const_spec((HIDDEN1, 1)),                               # b1
                const_spec((HIDDEN2, HIDDEN1)),                         # W2
                const_spec((HIDDEN2, 1)),                               # b2
                const_spec((NUM_CLASSES, HIDDEN2)),                     # W3
                const_spec((NUM_CLASSES, 1)),                           # b3
            ],
            out_specs=pl.BlockSpec((NUM_CLASSES, tile_b), lambda i: (0, i)),
        ),
        compiler_params=pltpu.CompilerParams(
            dimension_semantics=("parallel",),      # batch tiles shard across TCs
            vmem_limit_bytes=vmem_limit,
        ),
        cost_estimate=pl.CostEstimate(
            flops=flops, transcendentals=0, bytes_accessed=bytes_accessed),
    )(x_t, w1c, b1c, w2c, b2c, w3c, b3c)

    out_t = out_t[:, :B]
    if feature_major_out:
        return out_t                                      # [NUM_CLASSES, B]
    return out_t.T                                        # [B, NUM_CLASSES]


# ------------------------------- init / reference ---------------------------


def init_params(key):
    """PyTorch-style Linear init: U(-1/sqrt(fan_in), +1/sqrt(fan_in)).
    Weights torch-native [out, in]; biases [out, 1]."""
    def linear(key, fan_in, fan_out):
        kw, kb = jax.random.split(key)
        bound = 1.0 / jnp.sqrt(float(fan_in))
        w = jax.random.uniform(kw, (fan_out, fan_in), jnp.float32, -bound, bound)
        b = jax.random.uniform(kb, (fan_out, 1), jnp.float32, -bound, bound)
        return w, b

    k1, k2, k3 = jax.random.split(key, 3)
    w1, b1 = linear(k1, INPUT_SIZE, HIDDEN1)
    w2, b2 = linear(k2, HIDDEN1, HIDDEN2)
    w3, b3 = linear(k3, HIDDEN2, NUM_CLASSES)
    return (w1, b1, w2, b2, w3, b3)


def fcnn_reference(x, params, compute_dtype=jnp.float32, out_dtype=jnp.float32):
    """Pure-JAX reference; compute_dtype mirrors the kernel's operand dtype."""
    w1, b1, w2, b2, w3, b3 = params

    def dense(h, w, b):
        acc = jnp.dot(h.astype(compute_dtype), w.T.astype(compute_dtype),
                      preferred_element_type=jnp.float32)
        return acc + b.T

    h1 = jnp.maximum(dense(x, w1, b1), 0.0)
    h2 = jnp.maximum(dense(h1, w2, b2), 0.0)
    return dense(h2, w3, b3).astype(out_dtype)


# ------------------------------------ main -----------------------------------


if __name__ == "__main__":
    key = jax.random.PRNGKey(0)
    kparams, kx = jax.random.split(key)

    params = init_params(kparams)
    B = 300  # deliberately not a multiple of the tile -> exercises padding path
    x = jax.random.normal(kx, (B, INPUT_SIZE), jnp.float32)

    # Default fast path: bf16 operands, bf16 logits, params cast once.
    prepared = prepare_params(params, use_bf16=True)
    fwd = jax.jit(lambda xx: fcnn_forward(xx, prepared))
    out = jax.block_until_ready(fwd(x))
    assert out.shape == (B, NUM_CLASSES)

    # Tight check vs a reference using the same bf16-operand / f32-accumulate /
    # bf16-output path.
    ref_matched = fcnn_reference(x, params,
                                 compute_dtype=jnp.bfloat16,
                                 out_dtype=jnp.bfloat16)
    assert jnp.allclose(out.astype(jnp.float32), ref_matched.astype(jnp.float32),
                        atol=1e-2, rtol=1e-2), \
        "mismatch vs matched-precision reference"

    # Loose sanity check vs full-f32 math (bf16 rounding only).
    ref_f32 = fcnn_reference(x, params)
    assert jnp.allclose(out.astype(jnp.float32), ref_f32,
                        atol=5e-2, rtol=5e-2), "mismatch vs f32 reference"

    # Exact-f32 path (PyTorch-faithful dtypes).
    out_f32 = jax.block_until_ready(
        fcnn_forward(x, params, use_bf16=False, out_dtype=jnp.float32))
    assert out_f32.dtype == jnp.float32
    assert jnp.allclose(out_f32, ref_f32, atol=2e-3, rtol=2e-3), \
        "mismatch on f32 path"

    print("KERNEL_OK")
</pallas_src>

<mosaic_0001>
module attributes {stable_mosaic.version = 11 : i64} {
  func.func @fcnn_kernel(%arg0: i32, %arg1: memref<6x384xbf16, #tpu.memory_space<vmem>>, %arg2: memref<128x6xbf16, #tpu.memory_space<vmem>>, %arg3: memref<128x1xf32, #tpu.memory_space<vmem>>, %arg4: memref<64x128xbf16, #tpu.memory_space<vmem>>, %arg5: memref<64x1xf32, #tpu.memory_space<vmem>>, %arg6: memref<26x64xbf16, #tpu.memory_space<vmem>>, %arg7: memref<26x1xf32, #tpu.memory_space<vmem>>, %arg8: memref<26x384xbf16, #tpu.memory_space<vmem>>) attributes {dimension_semantics = [#tpu.dimension_semantics<parallel>], iteration_bounds = array<i64: 1>, scalar_prefetch = 0 : i64, scratch_operands = 0 : i64, tpu.core_type = #tpu.core_type<tc>, window_params = [{transform_indices = @transform_0, window_bounds = array<i64: 6, 384>}, {pipeline_mode = #tpu.pipeline_mode<synchronous>, transform_indices = @transform_1, window_bounds = array<i64: 128, 6>}, {pipeline_mode = #tpu.pipeline_mode<synchronous>, transform_indices = @transform_2, window_bounds = array<i64: 128, 1>}, {pipeline_mode = #tpu.pipeline_mode<synchronous>, transform_indices = @transform_3, window_bounds = array<i64: 64, 128>}, {pipeline_mode = #tpu.pipeline_mode<synchronous>, transform_indices = @transform_4, window_bounds = array<i64: 64, 1>}, {pipeline_mode = #tpu.pipeline_mode<synchronous>, transform_indices = @transform_5, window_bounds = array<i64: 26, 64>}, {pipeline_mode = #tpu.pipeline_mode<synchronous>, transform_indices = @transform_6, window_bounds = array<i64: 26, 1>}, {transform_indices = @transform_7, window_bounds = array<i64: 26, 384>}]} {
    %c0 = arith.constant 0 : index
    %c0_0 = arith.constant 0 : index
    %0 = vector.load %arg1[%c0, %c0_0] : memref<6x384xbf16, #tpu.memory_space<vmem>>, vector<6x384xbf16>
    %c0_1 = arith.constant 0 : index
    %c0_2 = arith.constant 0 : index
    %1 = vector.load %arg2[%c0_1, %c0_2] : memref<128x6xbf16, #tpu.memory_space<vmem>>, vector<128x6xbf16>
    %cst = arith.constant dense<0.000000e+00> : vector<128x384xf32>
    %2 = tpu.matmul %1, %0, %cst {dimension_numbers = #tpu.dot_dimension_numbers<[1], [0], [0], [1], [0, 0, 1, 1], [], []>} : vector<128x6xbf16>, vector<6x384xbf16>, vector<128x384xf32> -> vector<128x384xf32>
    %c0_3 = arith.constant 0 : index
    %c0_4 = arith.constant 0 : index
    %3 = vector.load %arg3[%c0_3, %c0_4] : memref<128x1xf32, #tpu.memory_space<vmem>>, vector<128x1xf32>
    %4 = vector.broadcast %3 : vector<128x1xf32> to vector<128x384xf32>
    %5 = arith.addf %2, %4 : vector<128x384xf32>
    %cst_5 = arith.constant 0.000000e+00 : f32
    %6 = vector.broadcast %cst_5 : f32 to vector<128x384xf32>
    %7 = arith.maximumf %5, %6 : vector<128x384xf32>
    %8 = arith.truncf %7 : vector<128x384xf32> to vector<128x384xbf16>
    %c0_6 = arith.constant 0 : index
    %c0_7 = arith.constant 0 : index
    %9 = vector.load %arg4[%c0_6, %c0_7] : memref<64x128xbf16, #tpu.memory_space<vmem>>, vector<64x128xbf16>
    %cst_8 = arith.constant dense<0.000000e+00> : vector<64x384xf32>
    %10 = tpu.matmul %9, %8, %cst_8 {dimension_numbers = #tpu.dot_dimension_numbers<[1], [0], [0], [1], [0, 0, 1, 1], [], []>} : vector<64x128xbf16>, vector<128x384xbf16>, vector<64x384xf32> -> vector<64x384xf32>
    %c0_9 = arith.constant 0 : index
    %c0_10 = arith.constant 0 : index
    %11 = vector.load %arg5[%c0_9, %c0_10] : memref<64x1xf32, #tpu.memory_space<vmem>>, vector<64x1xf32>
    %12 = vector.broadcast %11 : vector<64x1xf32> to vector<64x384xf32>
    %13 = arith.addf %10, %12 : vector<64x384xf32>
    %cst_11 = arith.constant 0.000000e+00 : f32
    %14 = vector.broadcast %cst_11 : f32 to vector<64x384xf32>
    %15 = arith.maximumf %13, %14 : vector<64x384xf32>
    %16 = arith.truncf %15 : vector<64x384xf32> to vector<64x384xbf16>
    %c0_12 = arith.constant 0 : index
    %c0_13 = arith.constant 0 : index
    %17 = vector.load %arg6[%c0_12, %c0_13] : memref<26x64xbf16, #tpu.memory_space<vmem>>, vector<26x64xbf16>
    %cst_14 = arith.constant dense<0.000000e+00> : vector<26x384xf32>
    %18 = tpu.matmul %17, %16, %cst_14 {dimension_numbers = #tpu.dot_dimension_numbers<[1], [0], [0], [1], [0, 0, 1, 1], [], []>} : vector<26x64xbf16>, vector<64x384xbf16>, vector<26x384xf32> -> vector<26x384xf32>
    %c0_15 = arith.constant 0 : index
    %c0_16 = arith.constant 0 : index
    %19 = vector.load %arg7[%c0_15, %c0_16] : memref<26x1xf32, #tpu.memory_space<vmem>>, vector<26x1xf32>
    %20 = vector.broadcast %19 : vector<26x1xf32> to vector<26x384xf32>
    %21 = arith.addf %18, %20 : vector<26x384xf32>
    %22 = arith.truncf %21 : vector<26x384xf32> to vector<26x384xbf16>
    %c0_17 = arith.constant 0 : index
    %c0_18 = arith.constant 0 : index
    %23 = vector.load %arg8[%c0_17, %c0_18] : memref<26x384xbf16, #tpu.memory_space<vmem>>, vector<26x384xbf16>
    tpu.vector_store %arg8[%c0_17, %c0_18], %22 {strides = array<i32>} : memref<26x384xbf16, #tpu.memory_space<vmem>>, vector<26x384xbf16>,
    return
  }
  func.func @transform_0(%arg0: i32) -> (i32, i32) {
    %c0_i32 = arith.constant 0 : i32
    %c0_i32_0 = arith.constant 0 : i32
    return %c0_i32, %arg0 : i32, i32
  }
  func.func @transform_1(%arg0: i32) -> (i32, i32) {
    %c0_i32 = arith.constant 0 : i32
    %c0_i32_0 = arith.constant 0 : i32
    %c0_i32_1 = arith.constant 0 : i32
    return %c0_i32, %c0_i32_0 : i32, i32
  }
  func.func @transform_2(%arg0: i32) -> (i32, i32) {
    %c0_i32 = arith.constant 0 : i32
    %c0_i32_0 = arith.constant 0 : i32
    %c0_i32_1 = arith.constant 0 : i32
    return %c0_i32, %c0_i32_0 : i32, i32
  }
  func.func @transform_3(%arg0: i32) -> (i32, i32) {
    %c0_i32 = arith.constant 0 : i32
    %c0_i32_0 = arith.constant 0 : i32
    %c0_i32_1 = arith.constant 0 : i32
    return %c0_i32, %c0_i32_0 : i32, i32
  }
  func.func @transform_4(%arg0: i32) -> (i32, i32) {
    %c0_i32 = arith.constant 0 : i32
    %c0_i32_0 = arith.constant 0 : i32
    %c0_i32_1 = arith.constant 0 : i32
    return %c0_i32, %c0_i32_0 : i32, i32
  }
  func.func @transform_5(%arg0: i32) -> (i32, i32) {
    %c0_i32 = arith.constant 0 : i32
    %c0_i32_0 = arith.constant 0 : i32
    %c0_i32_1 = arith.constant 0 : i32
    return %c0_i32, %c0_i32_0 : i32, i32
  }
  func.func @transform_6(%arg0: i32) -> (i32, i32) {
    %c0_i32 = arith.constant 0 : i32
    %c0_i32_0 = arith.constant 0 : i32
    %c0_i32_1 = arith.constant 0 : i32
    return %c0_i32, %c0_i32_0 : i32, i32
  }
  func.func @transform_7(%arg0: i32) -> (i32, i32) {
    %c0_i32 = arith.constant 0 : i32
    %c0_i32_0 = arith.constant 0 : i32
    return %c0_i32, %arg0 : i32, i32
  }
}

</mosaic_0001>

<llo_original>
// kernel: _lambda_.1
$region0: #{_lambda_.1}
  #allocation0 [shape = 'u32[]', space=smem, size = 0x4, offset = 0x4, fixed_abs, tag = 'smem constant byte address 0x4 - core index']
  #allocation1 [shape = 'u32[144,128]{1,0:T(1,128)}', space=vmem, size = 0x12000, scoped, tag = 'internal scratch']
  %s0 = inlined_call_operand.vmem [shape: bf16[6,384], index: 0, kind: input, shape index: {}]
  %s1 = inlined_call_operand.vmem [shape: bf16[128,6], index: 1, kind: input, shape index: {}]
  %s2 = inlined_call_operand.hbm [shape: f32[128,1], index: 2, kind: input, shape index: {}]
  %s3 = inlined_call_operand.hbm [shape: bf16[64,128], index: 3, kind: input, shape index: {}]
  %s4 = inlined_call_operand.hbm [shape: f32[64,1], index: 4, kind: input, shape index: {}]
  %s5 = inlined_call_operand.vmem [shape: bf16[26,64], index: 5, kind: input, shape index: {}]
  %s6 = inlined_call_operand.hbm [shape: f32[26,1], index: 6, kind: input, shape index: {}]
  %s7 = inlined_call_operand.vmem [shape: bf16[26,384], index: 7, kind: output, shape index: {}]
  %s8 = sld [smem:[#allocation0]]
  $region54: #{_lambda_.1} parent=0
    _
  %s10 = ssub.s32 1, %s8
  %s11 = scalar_select 0, %s10, %s8
  $region1: #{_lambda_.1} parent=0
    #allocation2 [shape = 'u8[65536]{0}', space=vmem, size = 0x10000, scoped, tag = 'input window, operand 2, single buffered']
    #allocation3 [shape = 's32[1]{0}', space=sflag, size = 0x4, scoped, tag = 'scoped memory for _lambda_.1']
    #allocation4 [shape = 'u8[16384]{0}', space=vmem, size = 0x4000, scoped, tag = 'input window, operand 3, single buffered']
    #allocation5 [shape = 's32[1]{0}', space=sflag, size = 0x4, scoped, tag = 'scoped memory for _lambda_.1']
    #allocation6 [shape = 'u8[32768]{0}', space=vmem, size = 0x8000, scoped, tag = 'input window, operand 4, single buffered']
    #allocation7 [shape = 'u8[16384]{0}', space=vmem, size = 0x4000, scoped, tag = 'input window, operand 6, single buffered']
    #allocation8 [shape = 's32[1]{0}', space=sflag, size = 0x4, scoped, tag = 'scoped memory for _lambda_.1']
    %12 = vsyncpa [#allocation3], 0
    %13 = vsyncpa [#allocation5], 0
    %14 = vsyncpa [#allocation8], 0
    // Predicated region
    $region2: #{_lambda_.1} parent=1 // pred_check
      _
    $region3: #{_lambda_.1} parent=1 // pred_check_branch
      %16 = sbr.rel (0) target = $region5
    $region4: #{_lambda_.1} parent=1 // pred_region
      _
    $region5: #{_lambda_.1} parent=1 // pred_fallthru
      _
    // Predicated region
    $region6: #{_lambda_.1} parent=1 // pred_check
      _
    $region7: #{_lambda_.1} parent=1 // pred_check_branch
      %18 = sbr.rel (0) target = $region9
    $region8: #{_lambda_.1} parent=1 // pred_region
      _
    $region9: #{_lambda_.1} parent=1 // pred_fallthru
      _
    // Predicated region
    $region10: #{_lambda_.1} parent=1 // pred_check
      _
    $region11: #{_lambda_.1} parent=1 // pred_check_branch
      %20 = sbr.rel (0) target = $region13
    $region12: #{_lambda_.1} parent=1 // pred_region
      %s22 = ssub.s32 2048, 2048
      %23 = vsyncadd [#allocation3], %s22
      %s24 = sshll.u32 [#allocation2], 4
      %s25 = int_to_ptr.vmem [resolvable:$true] %s24
      %30 = dma.hbm_to_vmem [thread:$0]  %s2, 2048, %s25, [#allocation3], 128, 128, 8
    $region13: #{_lambda_.1} parent=1 // pred_fallthru
      _
    // Predicated region
    $region14: #{_lambda_.1} parent=1 // pred_check
      _
    $region15: #{_lambda_.1} parent=1 // pred_check_branch
      %32 = sbr.rel (0) target = $region17
    $region16: #{_lambda_.1} parent=1 // pred_region
      %s34 = ssub.s32 512, 512
      %35 = vsyncadd [#allocation5], %s34
      %s36 = sshll.u32 [#allocation4], 4
      %s37 = int_to_ptr.vmem [resolvable:$true] %s36
      %42 = dma.hbm_to_vmem [thread:$0]  %s3, 512, %s37, [#allocation5], 64, 64, 4
    $region17: #{_lambda_.1} parent=1 // pred_fallthru
      _
    // Predicated region
    $region18: #{_lambda_.1} parent=1 // pred_check
      _
    $region19: #{_lambda_.1} parent=1 // pred_check_branch
      %44 = sbr.rel (0) target = $region21
    $region20: #{_lambda_.1} parent=1 // pred_region
      %s46 = ssub.s32 1024, 1024
      %47 = vsyncadd [#allocation5], %s46
      %s48 = sshll.u32 [#allocation6], 4
      %s49 = int_to_ptr.vmem [resolvable:$true] %s48
      %54 = dma.hbm_to_vmem [thread:$0]  %s4, 1024, %s49, [#allocation5], 128, 128, 8
    $region21: #{_lambda_.1} parent=1 // pred_fallthru
      _
    // Predicated region
    $region22: #{_lambda_.1} parent=1 // pred_check
      _
    $region23: #{_lambda_.1} parent=1 // pred_check_branch
      %56 = sbr.rel (0) target = $region25
    $region24: #{_lambda_.1} parent=1 // pred_region
      _
    $region25: #{_lambda_.1} parent=1 // pred_fallthru
      _
    // Predicated region
    $region26: #{_lambda_.1} parent=1 // pred_check
      _
    $region27: #{_lambda_.1} parent=1 // pred_check_branch
      %58 = sbr.rel (0) target = $region29
    $region28: #{_lambda_.1} parent=1 // pred_region
      %s60 = ssub.s32 512, 512
      %61 = vsyncadd [#allocation8], %s60
      %s62 = sshll.u32 [#allocation7], 4
      %s63 = int_to_ptr.vmem [resolvable:$true] %s62
      %68 = dma.hbm_to_vmem [thread:$0]  %s6, 512, %s63, [#allocation8], 128, 128, 8
    $region29: #{_lambda_.1} parent=1 // pred_fallthru
      _
    // Predicated region
    $region30: #{_lambda_.1} parent=1 // pred_check
      _
    $region31: #{_lambda_.1} parent=1 // pred_check_branch
      %70 = sbr.rel (0) target = $region33
    $region32: #{_lambda_.1} parent=1 // pred_region
      %71 = dma.done [#allocation3], 2048
    $region33: #{_lambda_.1} parent=1 // pred_fallthru
      _
    // Predicated region
    $region34: #{_lambda_.1} parent=1 // pred_check
      _
    $region35: #{_lambda_.1} parent=1 // pred_check_branch
      %73 = sbr.rel (0) target = $region37
    $region36: #{_lambda_.1} parent=1 // pred_region
      %74 = dma.done [#allocation5], 512
    $region37: #{_lambda_.1} parent=1 // pred_fallthru
      _
    // Predicated region
    $region38: #{_lambda_.1} parent=1 // pred_check
      _
    $region39: #{_lambda_.1} parent=1 // pred_check_branch
      %76 = sbr.rel (0) target = $region41
    $region40: #{_lambda_.1} parent=1 // pred_region
      %77 = dma.done [#allocation5], 1024
    $region41: #{_lambda_.1} parent=1 // pred_fallthru
      _
    // Predicated region
    $region42: #{_lambda_.1} parent=1 // pred_check
      _
    $region43: #{_lambda_.1} parent=1 // pred_check_branch
      %79 = sbr.rel (0) target = $region45
    $region44: #{_lambda_.1} parent=1 // pred_region
      %80 = dma.done [#allocation8], 512
    $region45: #{_lambda_.1} parent=1 // pred_fallthru
      _
    %v82 = vld [vmem:[%s0] sm:$0x77]
    %v83 = vld [vmem:[%s0 + $0x8] sm:$0x7]
    %v84 = vld [vmem:[%s1] sm:$0xf]
    %v85 = vld [vmem:[%s1 + $0x4] sm:$0xf]
    %v86 = vld [vmem:[%s1 + $0x8] sm:$0xf]
    %v87 = vld [vmem:[%s1 + $0xc] sm:$0xf]
    %v88 = vld [vmem:[%s1 + $0x10] sm:$0xf]
    %v89 = vld [vmem:[%s1 + $0x14] sm:$0xf]
    %v90 = vld [vmem:[%s1 + $0x18] sm:$0xf]
    %v91 = vld [vmem:[%s1 + $0x1c] sm:$0xf]
    %v92 = vld [vmem:[%s1 + $0x20] sm:$0xf]
    %v93 = vld [vmem:[%s1 + $0x24] sm:$0xf]
    %v94 = vld [vmem:[%s1 + $0x28] sm:$0xf]
    %v95 = vld [vmem:[%s1 + $0x2c] sm:$0xf]
    %v96 = vld [vmem:[%s1 + $0x30] sm:$0xf]
    %v97 = vld [vmem:[%s1 + $0x34] sm:$0xf]
    %v98 = vld [vmem:[%s1 + $0x38] sm:$0xf]
    %v99 = vld [vmem:[%s1 + $0x3c] sm:$0xf]
    %v100 = vld [vmem:[#allocation2] sm:$0xff]
    %v101 = vld [vmem:[#allocation2 + $0x8] sm:$0xff]
    %v102 = vld [vmem:[#allocation2 + $0x10] sm:$0xff]
    %v103 = vld [vmem:[#allocation2 + $0x18] sm:$0xff]
    %v104 = vld [vmem:[#allocation2 + $0x20] sm:$0xff]
    %v105 = vld [vmem:[#allocation2 + $0x28] sm:$0xff]
    %v106 = vld [vmem:[#allocation2 + $0x30] sm:$0xff]
    %v107 = vld [vmem:[#allocation2 + $0x38] sm:$0xff]
    %v108 = vld [vmem:[#allocation2 + $0x40] sm:$0xff]
    %v109 = vld [vmem:[#allocation2 + $0x48] sm:$0xff]
    %v110 = vld [vmem:[#allocation2 + $0x50] sm:$0xff]
    %v111 = vld [vmem:[#allocation2 + $0x58] sm:$0xff]
    %v112 = vld [vmem:[#allocation2 + $0x60] sm:$0xff]
    %v113 = vld [vmem:[#allocation2 + $0x68] sm:$0xff]
    %v114 = vld [vmem:[#allocation2 + $0x70] sm:$0xff]
    %v115 = vld [vmem:[#allocation2 + $0x78] sm:$0xff]
    %117 = vset.pattern.permute.xlu0 0
    %118 = vperm.xlu0 %117, %v100
    %v119 = vpop.permute.xlu0 %118
    %122 = vset.pattern.permute.xlu0 0
    %123 = vperm.xlu0 %122, %v101
    %v124 = vpop.permute.xlu0 %123
    %127 = vset.pattern.permute.xlu0 0
    %128 = vperm.xlu0 %127, %v102
    %v129 = vpop.permute.xlu0 %128
    %132 = vset.pattern.permute.xlu0 0
    %133 = vperm.xlu0 %132, %v103
    %v134 = vpop.permute.xlu0 %133
    %137 = vset.pattern.permute.xlu0 0
    %138 = vperm.xlu0 %137, %v104
    %v139 = vpop.permute.xlu0 %138
    %142 = vset.pattern.permute.xlu0 0
    %143 = vperm.xlu0 %142, %v105
    %v144 = vpop.permute.xlu0 %143
    %147 = vset.pattern.permute.xlu0 0
    %148 = vperm.xlu0 %147, %v106
    %v149 = vpop.permute.xlu0 %148
    %152 = vset.pattern.permute.xlu0 0
    %153 = vperm.xlu0 %152, %v107
    %v154 = vpop.permute.xlu0 %153
    %157 = vset.pattern.permute.xlu0 0
    %158 = vperm.xlu0 %157, %v108
    %v159 = vpop.permute.xlu0 %158
    %162 = vset.pattern.permute.xlu0 0
    %163 = vperm.xlu0 %162, %v109
    %v164 = vpop.permute.xlu0 %163
    %167 = vset.pattern.permute.xlu0 0
    %168 = vperm.xlu0 %167, %v110
    %v169 = vpop.permute.xlu0 %168
    %172 = vset.pattern.permute.xlu0 0
    %173 = vperm.xlu0 %172, %v111
    %v174 = vpop.permute.xlu0 %173
    %177 = vset.pattern.permute.xlu0 0
    %178 = vperm.xlu0 %177, %v112
    %v179 = vpop.permute.xlu0 %178
    %182 = vset.pattern.permute.xlu0 0
    %183 = vperm.xlu0 %182, %v113
    %v184 = vpop.permute.xlu0 %183
    %187 = vset.pattern.permute.xlu0 0
    %188 = vperm.xlu0 %187, %v114
    %v189 = vpop.permute.xlu0 %188
    %192 = vset.pattern.permute.xlu0 0
    %193 = vperm.xlu0 %192, %v115
    %v194 = vpop.permute.xlu0 %193
    %v212 = vunpack.c.l.b16 %v84
    %v213 = vunpack.c.l.b16 %v85
    %v214 = vunpack.c.l.b16 %v86
    %v215 = vunpack.c.l.b16 %v87
    %v216 = vunpack.c.l.b16 %v88
    %v217 = vunpack.c.l.b16 %v89
    %v218 = vunpack.c.l.b16 %v90
    %v219 = vunpack.c.l.b16 %v91
    %v220 = vunpack.c.l.b16 %v92
    %v221 = vunpack.c.l.b16 %v93
    %v222 = vunpack.c.l.b16 %v94
    %v223 = vunpack.c.l.b16 %v95
    %v224 = vunpack.c.l.b16 %v96
    %v225 = vunpack.c.l.b16 %v97
    %v226 = vunpack.c.l.b16 %v98
    %v227 = vunpack.c.l.b16 %v99
    %v228 = vpack.c.b16 %v213, %v212
    %v229 = vpack.c.b16 %v215, %v214
    %v230 = vpack.c.b16 %v217, %v216
    %v231 = vpack.c.b16 %v219, %v218
    %v232 = vpack.c.b16 %v221, %v220
    %v233 = vpack.c.b16 %v223, %v222
    %v234 = vpack.c.b16 %v225, %v224
    %v235 = vpack.c.b16 %v227, %v226
    %v238 = vunpack.c.l.b16 %v82
    %v239 = vunpack.c.h.b16 %v82
    %v240 = vunpack.c.l.b16 %v83
    %v241 = vpack.c.b16 %v238, %v238
    %v242 = vpack.c.b16 %v239, %v239
    %v243 = vpack.c.b16 %v240, %v240
    %vm244 = vcmask 48128
    %v246 = vsel %vm244, %v228, 0
    %v249 = vsel %vm244, %v229, 0
    %v252 = vsel %vm244, %v230, 0
    %v255 = vsel %vm244, %v231, 0
    %v258 = vsel %vm244, %v232, 0
    %v261 = vsel %vm244, %v233, 0
    %v264 = vsel %vm244, %v234, 0
    %v267 = vsel %vm244, %v235, 0
    %vm269 = vcmask 1042432
    %v271 = vsel %vm269, %v241, 0
    %v274 = vsel %vm269, %v242, 0
    %v277 = vsel %vm269, %v243, 0
    %279 = vmatprep.subr.bf16.mxu0 %v274
    %280 = vmatpush1.bf16.msra.mxu0 %v271
    %281 = vmatprep.subr.bf16.mxu0 0
    %282 = vmatpush1.bf16.msra.mxu0 0
    %283 = vmatprep.subr.bf16.mxu0 0
    %284 = vmatpush1.bf16.msra.mxu0 0
    %285 = vmatprep.subr.bf16.mxu0 0
    %286 = vmatpush1.bf16.msra.mxu0 0
    %287 = vmatprep.subr.bf16.mxu0 0
    %288 = vmatpush1.bf16.msra.mxu0 0
    %289 = vmatprep.subr.bf16.mxu0 0
    %290 = vmatpush1.bf16.msra.mxu0 0
    %291 = vmatprep.subr.bf16.mxu0 0
    %292 = vmatpush1.bf16.msra.mxu0 0
    %293 = vmatprep.subr.bf16.mxu0 0
    %294 = vmatpush1.bf16.msra.mxu0 0
    %295 = vmatprep.subr.bf16.mxu0 0
    %296 = vmatpush1.bf16.msra.mxu0 0
    %297 = vmatprep.subr.bf16.mxu0 0
    %298 = vmatpush1.bf16.msra.mxu0 0
    %299 = vmatprep.subr.bf16.mxu0 0
    %300 = vmatpush1.bf16.msra.mxu0 0
    %301 = vmatprep.subr.bf16.mxu0 0
    %302 = vmatpush1.bf16.msra.mxu0 0
    %303 = vmatprep.subr.bf16.mxu0 0
    %304 = vmatpush1.bf16.msra.mxu0 0
    %305 = vmatprep.subr.bf16.mxu0 0
    %306 = vmatpush1.bf16.msra.mxu0 0
    %307 = vmatprep.subr.bf16.mxu0 0
    %308 = vmatpush1.bf16.msra.mxu0 0
    %309 = vmatprep.subr.bf16.mxu0 0
    %310 = vmatpush1.bf16.msra.mxu0 0
    %311 = vmatprep.mubr.bf16.mxu0 0
    %312 = vmatmul.mubr.bf16.gmra.mrb[0].mxu0 %v246
    %v313 = vpop.f32.mrb[0].mxu0
    %v314 = vadd.f32 %v119, %v313
    %v315 = vpop.f32.mrb[0].mxu0
    %v316 = vadd.f32 %v119, %v315
    %v317 = vpop.f32.mrb[0].mxu0
    %v318 = vadd.f32 %v124, %v317
    %v319 = vpop.f32.mrb[0].mxu0
    %v320 = vadd.f32 %v124, %v319
    %321 = vmatprep.mubr.bf16.mxu0 0
    %322 = vmatmul.mubr.bf16.gmra.mrb[0].mxu0 %v249
    %v323 = vpop.f32.mrb[0].mxu0
    %v324 = vadd.f32 %v129, %v323
    %v325 = vpop.f32.mrb[0].mxu0
    %v326 = vadd.f32 %v129, %v325
    %v327 = vpop.f32.mrb[0].mxu0
    %v328 = vadd.f32 %v134, %v327
    %v329 = vpop.f32.mrb[0].mxu0
    %v330 = vadd.f32 %v134, %v329
    %331 = vmatprep.mubr.bf16.mxu0 0
    %332 = vmatmul.mubr.bf16.gmra.mrb[0].mxu0 %v252
    %v333 = vpop.f32.mrb[0].mxu0
    %v334 = vadd.f32 %v139, %v333
    %v335 = vpop.f32.mrb[0].mxu0
    %v336 = vadd.f32 %v139, %v335
    %v337 = vpop.f32.mrb[0].mxu0
    %v338 = vadd.f32 %v144, %v337
    %v339 = vpop.f32.mrb[0].mxu0
    %v340 = vadd.f32 %v144, %v339
    %341 = vmatprep.mubr.bf16.mxu0 0
    %342 = vmatmul.mubr.bf16.gmra.mrb[0].mxu0 %v255
    %v343 = vpop.f32.mrb[0].mxu0
    %v344 = vadd.f32 %v149, %v343
    %v345 = vpop.f32.mrb[0].mxu0
    %v346 = vadd.f32 %v149, %v345
    %v347 = vpop.f32.mrb[0].mxu0
    %v348 = vadd.f32 %v154, %v347
    %v349 = vpop.f32.mrb[0].mxu0
    %v350 = vadd.f32 %v154, %v349
    %351 = vmatprep.mubr.bf16.mxu0 0
    %352 = vmatmul.mubr.bf16.gmra.mrb[0].mxu0 %v258
    %v353 = vpop.f32.mrb[0].mxu0
    %v354 = vadd.f32 %v159, %v353
    %v355 = vpop.f32.mrb[0].mxu0
    %v356 = vadd.f32 %v159, %v355
    %v357 = vpop.f32.mrb[0].mxu0
    %v358 = vadd.f32 %v164, %v357
    %v359 = vpop.f32.mrb[0].mxu0
    %v360 = vadd.f32 %v164, %v359
    %361 = vmatprep.mubr.bf16.mxu0 0
    %362 = vmatmul.mubr.bf16.gmra.mrb[0].mxu0 %v261
    %v363 = vpop.f32.mrb[0].mxu0
    %v364 = vadd.f32 %v169, %v363
    %v365 = vpop.f32.mrb[0].mxu0
    %v366 = vadd.f32 %v169, %v365
    %v367 = vpop.f32.mrb[0].mxu0
    %v368 = vadd.f32 %v174, %v367
    %v369 = vpop.f32.mrb[0].mxu0
    %v370 = vadd.f32 %v174, %v369
    %371 = vmatprep.mubr.bf16.mxu0 0
    %372 = vmatmul.mubr.bf16.gmra.mrb[0].mxu0 %v264
    %v373 = vpop.f32.mrb[0].mxu0
    %v374 = vadd.f32 %v179, %v373
    %v375 = vpop.f32.mrb[0].mxu0
    %v376 = vadd.f32 %v179, %v375
    %v377 = vpop.f32.mrb[0].mxu0
    %v378 = vadd.f32 %v184, %v377
    %v379 = vpop.f32.mrb[0].mxu0
    %v380 = vadd.f32 %v184, %v379
    %381 = vmatprep.mubr.bf16.mxu0 0
    %382 = vmatmul.mubr.bf16.gmra.mrb[0].mxu0 %v267
    %v383 = vpop.f32.mrb[0].mxu0
    %v384 = vadd.f32 %v189, %v383
    %v385 = vpop.f32.mrb[0].mxu0
    %v386 = vadd.f32 %v189, %v385
    %v387 = vpop.f32.mrb[0].mxu0
    %v388 = vadd.f32 %v194, %v387
    %v389 = vpop.f32.mrb[0].mxu0
    %v390 = vadd.f32 %v194, %v389
    %391 = vdwg.mxu0
    %392 = vmatprep.subr.bf16.mxu0 0
    %393 = vmatpush1.bf16.msra.mxu0 %v277
    %394 = vmatprep.subr.bf16.mxu0 0
    %395 = vmatpush1.bf16.msra.mxu0 0
    %396 = vmatprep.subr.bf16.mxu0 0
    %397 = vmatpush1.bf16.msra.mxu0 0
    %398 = vmatprep.subr.bf16.mxu0 0
    %399 = vmatpush1.bf16.msra.mxu0 0
    %400 = vmatprep.subr.bf16.mxu0 0
    %401 = vmatpush1.bf16.msra.mxu0 0
    %402 = vmatprep.subr.bf16.mxu0 0
    %403 = vmatpush1.bf16.msra.mxu0 0
    %404 = vmatprep.subr.bf16.mxu0 0
    %405 = vmatpush1.bf16.msra.mxu0 0
    %406 = vmatprep.subr.bf16.mxu0 0
    %407 = vmatpush1.bf16.msra.mxu0 0
    %408 = vmatprep.subr.bf16.mxu0 0
    %409 = vmatpush1.bf16.msra.mxu0 0
    %410 = vmatprep.subr.bf16.mxu0 0
    %411 = vmatpush1.bf16.msra.mxu0 0
    %412 = vmatprep.subr.bf16.mxu0 0
    %413 = vmatpush1.bf16.msra.mxu0 0
    %414 = vmatprep.subr.bf16.mxu0 0
    %415 = vmatpush1.bf16.msra.mxu0 0
    %416 = vmatprep.subr.bf16.mxu0 0
    %417 = vmatpush1.bf16.msra.mxu0 0
    %418 = vmatprep.subr.bf16.mxu0 0
    %419 = vmatpush1.bf16.msra.mxu0 0
    %420 = vmatprep.subr.bf16.mxu0 0
    %421 = vmatpush1.bf16.msra.mxu0 0
    %422 = vmatprep.subr.bf16.mxu0 0
    %423 = vmatpush1.bf16.msra.mxu0 0
    %424 = vmatprep.mubr.bf16.mxu0 0
    %425 = vmatmul.mubr.bf16.gmra.mrb[0].mxu0 %v246
    %v426 = vpop.f32.mrb[0].mxu0
    %v427 = vadd.f32 %v119, %v426
    %v428 = vpop.f32.mrb[0].mxu0
    %v429 = vpop.f32.mrb[0].mxu0
    %v430 = vadd.f32 %v124, %v429
    %v431 = vpop.f32.mrb[0].mxu0
    %432 = vmatprep.mubr.bf16.mxu0 0
    %433 = vmatmul.mubr.bf16.gmra.mrb[0].mxu0 %v249
    %v434 = vpop.f32.mrb[0].mxu0
    %v435 = vadd.f32 %v129, %v434
    %v436 = vpop.f32.mrb[0].mxu0
    %v437 = vpop.f32.mrb[0].mxu0
    %v438 = vadd.f32 %v134, %v437
    %v439 = vpop.f32.mrb[0].mxu0
    %440 = vmatprep.mubr.bf16.mxu0 0
    %441 = vmatmul.mubr.bf16.gmra.mrb[0].mxu0 %v252
    %v442 = vpop.f32.mrb[0].mxu0
    %v443 = vadd.f32 %v139, %v442
    %v444 = vpop.f32.mrb[0].mxu0
    %v445 = vpop.f32.mrb[0].mxu0
    %v446 = vadd.f32 %v144, %v445
    %v447 = vpop.f32.mrb[0].mxu0
    %448 = vmatprep.mubr.bf16.mxu0 0
    %449 = vmatmul.mubr.bf16.gmra.mrb[0].mxu0 %v255
    %v450 = vpop.f32.mrb[0].mxu0
    %v451 = vadd.f32 %v149, %v450
    %v452 = vpop.f32.mrb[0].mxu0
    %v453 = vpop.f32.mrb[0].mxu0
    %v454 = vadd.f32 %v154, %v453
    %v455 = vpop.f32.mrb[0].mxu0
    %456 = vmatprep.mubr.bf16.mxu0 0
    %457 = vmatmul.mubr.bf16.gmra.mrb[0].mxu0 %v258
    %v458 = vpop.f32.mrb[0].mxu0
    %v459 = vadd.f32 %v159, %v458
    %v460 = vpop.f32.mrb[0].mxu0
    %v461 = vpop.f32.mrb[0].mxu0
    %v462 = vadd.f32 %v164, %v461
    %v463 = vpop.f32.mrb[0].mxu0
    %464 = vmatprep.mubr.bf16.mxu0 0
    %465 = vmatmul.mubr.bf16.gmra.mrb[0].mxu0 %v261
    %v466 = vpop.f32.mrb[0].mxu0
    %v467 = vadd.f32 %v169, %v466
    %v468 = vpop.f32.mrb[0].mxu0
    %v469 = vpop.f32.mrb[0].mxu0
    %v470 = vadd.f32 %v174, %v469
    %v471 = vpop.f32.mrb[0].mxu0
    %472 = vmatprep.mubr.bf16.mxu0 0
    %473 = vmatmul.mubr.bf16.gmra.mrb[0].mxu0 %v264
    %v474 = vpop.f32.mrb[0].mxu0
    %v475 = vadd.f32 %v179, %v474
    %v476 = vpop.f32.mrb[0].mxu0
    %v477 = vpop.f32.mrb[0].mxu0
    %v478 = vadd.f32 %v184, %v477
    %v479 = vpop.f32.mrb[0].mxu0
    %480 = vmatprep.mubr.bf16.mxu0 0
    %481 = vmatmul.mubr.bf16.gmra.mrb[0].mxu0 %v267
    %v482 = vpop.f32.mrb[0].mxu0
    %v483 = vadd.f32 %v189, %v482
    %v484 = vpop.f32.mrb[0].mxu0
    %v485 = vpop.f32.mrb[0].mxu0
    %v486 = vadd.f32 %v194, %v485
    %v487 = vpop.f32.mrb[0].mxu0
    %488 = vdwg.mxu0
    %v489 = vmax.f32 %v314, 0.0
    %v490 = vmax.f32 %v316, 0.0
    %v491 = vmax.f32 %v427, 0.0
    %v492 = vmax.f32 %v318, 0.0
    %v493 = vmax.f32 %v320, 0.0
    %v494 = vmax.f32 %v430, 0.0
    %v495 = vmax.f32 %v324, 0.0
    %v496 = vmax.f32 %v326, 0.0
    %v497 = vmax.f32 %v435, 0.0
    %v498 = vmax.f32 %v328, 0.0
    %v499 = vmax.f32 %v330, 0.0
    %v500 = vmax.f32 %v438, 0.0
    %v501 = vmax.f32 %v334, 0.0
    %v502 = vmax.f32 %v336, 0.0
    %v503 = vmax.f32 %v443, 0.0
    %v504 = vmax.f32 %v338, 0.0
    %v505 = vmax.f32 %v340, 0.0
    %v506 = vmax.f32 %v446, 0.0
    %v507 = vmax.f32 %v344, 0.0
    %v508 = vmax.f32 %v346, 0.0
    %v509 = vmax.f32 %v451, 0.0
    %v510 = vmax.f32 %v348, 0.0
    %v511 = vmax.f32 %v350, 0.0
    %v512 = vmax.f32 %v454, 0.0
    %v513 = vmax.f32 %v354, 0.0
    %v514 = vmax.f32 %v356, 0.0
    %v515 = vmax.f32 %v459, 0.0
    %v516 = vmax.f32 %v358, 0.0
    %v517 = vmax.f32 %v360, 0.0
    %v518 = vmax.f32 %v462, 0.0
    %v519 = vmax.f32 %v364, 0.0
    %v520 = vmax.f32 %v366, 0.0
    %v521 = vmax.f32 %v467, 0.0
    %v522 = vmax.f32 %v368, 0.0
    %v523 = vmax.f32 %v370, 0.0
    %v524 = vmax.f32 %v470, 0.0
    %v525 = vmax.f32 %v374, 0.0
    %v526 = vmax.f32 %v376, 0.0
    %v527 = vmax.f32 %v475, 0.0
    %v528 = vmax.f32 %v378, 0.0
    %v529 = vmax.f32 %v380, 0.0
    %v530 = vmax.f32 %v478, 0.0
    %v531 = vmax.f32 %v384, 0.0
    %v532 = vmax.f32 %v386, 0.0
    %v533 = vmax.f32 %v483, 0.0
    %v534 = vmax.f32 %v388, 0.0
    %v535 = vmax.f32 %v390, 0.0
    %v536 = vmax.f32 %v486, 0.0
    %v537 = vpack.c.bf16 %v492, %v489
    %v538 = vpack.c.bf16 %v493, %v490
    %v539 = vpack.c.bf16 %v494, %v491
    %v540 = vpack.c.bf16 %v498, %v495
    %v541 = vpack.c.bf16 %v499, %v496
    %v542 = vpack.c.bf16 %v500, %v497
    %v543 = vpack.c.bf16 %v504, %v501
    %v544 = vpack.c.bf16 %v505, %v502
    %v545 = vpack.c.bf16 %v506, %v503
    %v546 = vpack.c.bf16 %v510, %v507
    %v547 = vpack.c.bf16 %v511, %v508
    %v548 = vpack.c.bf16 %v512, %v509
    %v549 = vpack.c.bf16 %v516, %v513
    %v550 = vpack.c.bf16 %v517, %v514
    %v551 = vpack.c.bf16 %v518, %v515
    %v552 = vpack.c.bf16 %v522, %v519
    %v553 = vpack.c.bf16 %v523, %v520
    %v554 = vpack.c.bf16 %v524, %v521
    %v555 = vpack.c.bf16 %v528, %v525
    %v556 = vpack.c.bf16 %v529, %v526
    %v557 = vpack.c.bf16 %v530, %v527
    %v558 = vpack.c.bf16 %v534, %v531
    %v559 = vpack.c.bf16 %v535, %v532
    %v560 = vpack.c.bf16 %v536, %v533
    %v561 = vld [vmem:[#allocation4] sm:$0xf]
    %v562 = vld [vmem:[#allocation4 + $0x4] sm:$0xf]
    %v563 = vld [vmem:[#allocation4 + $0x8] sm:$0xf]
    %v564 = vld [vmem:[#allocation4 + $0xc] sm:$0xf]
    %v565 = vld [vmem:[#allocation4 + $0x10] sm:$0xf]
    %v566 = vld [vmem:[#allocation4 + $0x14] sm:$0xf]
    %v567 = vld [vmem:[#allocation4 + $0x18] sm:$0xf]
    %v568 = vld [vmem:[#allocation4 + $0x1c] sm:$0xf]
    %v569 = vld [vmem:[#allocation6] sm:$0xff]
    %v570 = vld [vmem:[#allocation6 + $0x8] sm:$0xff]
    %v571 = vld [vmem:[#allocation6 + $0x10] sm:$0xff]
    %v572 = vld [vmem:[#allocation6 + $0x18] sm:$0xff]
    %v573 = vld [vmem:[#allocation6 + $0x20] sm:$0xff]
    %v574 = vld [vmem:[#allocation6 + $0x28] sm:$0xff]
    %v575 = vld [vmem:[#allocation6 + $0x30] sm:$0xff]
    %v576 = vld [vmem:[#allocation6 + $0x38] sm:$0xff]
    %578 = vset.pattern.permute.xlu0 0
    %579 = vperm.xlu0 %578, %v569
    %v580 = vpop.permute.xlu0 %579
    %583 = vset.pattern.permute.xlu0 0
    %584 = vperm.xlu0 %583, %v570
    %v585 = vpop.permute.xlu0 %584
    %588 = vset.pattern.permute.xlu0 0
    %589 = vperm.xlu0 %588, %v571
    %v590 = vpop.permute.xlu0 %589
    %593 = vset.pattern.permute.xlu0 0
    %594 = vperm.xlu0 %593, %v572
    %v595 = vpop.permute.xlu0 %594
    %598 = vset.pattern.permute.xlu0 0
    %599 = vperm.xlu0 %598, %v573
    %v600 = vpop.permute.xlu0 %599
    %603 = vset.pattern.permute.xlu0 0
    %604 = vperm.xlu0 %603, %v574
    %v605 = vpop.permute.xlu0 %604
    %608 = vset.pattern.permute.xlu0 0
    %609 = vperm.xlu0 %608, %v575
    %v610 = vpop.permute.xlu0 %609
    %613 = vset.pattern.permute.xlu0 0
    %614 = vperm.xlu0 %613, %v576
    %v615 = vpop.permute.xlu0 %614
    %v625 = vunpack.c.l.b16 %v561
    %v626 = vunpack.c.l.b16 %v562
    %v627 = vunpack.c.l.b16 %v563
    %v628 = vunpack.c.l.b16 %v564
    %v629 = vunpack.c.l.b16 %v565
    %v630 = vunpack.c.l.b16 %v566
    %v631 = vunpack.c.l.b16 %v567
    %v632 = vunpack.c.l.b16 %v568
    %v633 = vpack.c.b16 %v626, %v625
    %v634 = vpack.c.b16 %v628, %v627
    %v635 = vpack.c.b16 %v630, %v629
    %v636 = vpack.c.b16 %v632, %v631
    %641 = vmatprep.subr.bf16.mxu0 %v538
    %642 = vmatpush1.bf16.msra.mxu0 %v537
    %643 = vmatprep.subr.bf16.mxu0 %v541
    %644 = vmatpush1.bf16.msra.mxu0 %v540
    %645 = vmatprep.subr.bf16.mxu0 %v544
    %646 = vmatpush1.bf16.msra.mxu0 %v543
    %647 = vmatprep.subr.bf16.mxu0 %v547
    %648 = vmatpush1.bf16.msra.mxu0 %v546
    %649 = vmatprep.subr.bf16.mxu0 %v550
    %650 = vmatpush1.bf16.msra.mxu0 %v549
    %651 = vmatprep.subr.bf16.mxu0 %v553
    %652 = vmatpush1.bf16.msra.mxu0 %v552
    %653 = vmatprep.subr.bf16.mxu0 %v556
    %654 = vmatpush1.bf16.msra.mxu0 %v555
    %655 = vmatprep.subr.bf16.mxu0 %v559
    %656 = vmatpush1.bf16.msra.mxu0 %v558
    %657 = vmatprep.subr.bf16.mxu0 0
    %658 = vmatpush1.bf16.msra.mxu0 0
    %659 = vmatprep.subr.bf16.mxu0 0
    %660 = vmatpush1.bf16.msra.mxu0 0
    %661 = vmatprep.subr.bf16.mxu0 0
    %662 = vmatpush1.bf16.msra.mxu0 0
    %663 = vmatprep.subr.bf16.mxu0 0
    %664 = vmatpush1.bf16.msra.mxu0 0
    %665 = vmatprep.subr.bf16.mxu0 0
    %666 = vmatpush1.bf16.msra.mxu0 0
    %667 = vmatprep.subr.bf16.mxu0 0
    %668 = vmatpush1.bf16.msra.mxu0 0
    %669 = vmatprep.subr.bf16.mxu0 0
    %670 = vmatpush1.bf16.msra.mxu0 0
    %671 = vmatprep.subr.bf16.mxu0 0
    %672 = vmatpush1.bf16.msra.mxu0 0
    %673 = vmatprep.mubr.bf16.mxu0 0
    %674 = vmatmul.mubr.bf16.gmra.mrb[0].mxu0 %v633
    %v675 = vpop.f32.mrb[0].mxu0
    %v676 = vadd.f32 %v580, %v675
    %v677 = vpop.f32.mrb[0].mxu0
    %v678 = vadd.f32 %v580, %v677
    %v679 = vpop.f32.mrb[0].mxu0
    %v680 = vadd.f32 %v585, %v679
    %v681 = vpop.f32.mrb[0].mxu0
    %v682 = vadd.f32 %v585, %v681
    %683 = vmatprep.mubr.bf16.mxu0 0
    %684 = vmatmul.mubr.bf16.gmra.mrb[0].mxu0 %v634
    %v685 = vpop.f32.mrb[0].mxu0
    %v686 = vadd.f32 %v590, %v685
    %v687 = vpop.f32.mrb[0].mxu0
    %v688 = vadd.f32 %v590, %v687
    %v689 = vpop.f32.mrb[0].mxu0
    %v690 = vadd.f32 %v595, %v689
    %v691 = vpop.f32.mrb[0].mxu0
    %v692 = vadd.f32 %v595, %v691
    %693 = vmatprep.mubr.bf16.mxu0 0
    %694 = vmatmul.mubr.bf16.gmra.mrb[0].mxu0 %v635
    %v695 = vpop.f32.mrb[0].mxu0
    %v696 = vadd.f32 %v600, %v695
    %v697 = vpop.f32.mrb[0].mxu0
    %v698 = vadd.f32 %v600, %v697
    %v699 = vpop.f32.mrb[0].mxu0
    %v700 = vadd.f32 %v605, %v699
    %v701 = vpop.f32.mrb[0].mxu0
    %v702 = vadd.f32 %v605, %v701
    %703 = vmatprep.mubr.bf16.mxu0 0
    %704 = vmatmul.mubr.bf16.gmra.mrb[0].mxu0 %v636
    %v705 = vpop.f32.mrb[0].mxu0
    %v706 = vadd.f32 %v610, %v705
    %v707 = vpop.f32.mrb[0].mxu0
    %v708 = vadd.f32 %v610, %v707
    %v709 = vpop.f32.mrb[0].mxu0
    %v710 = vadd.f32 %v615, %v709
    %v711 = vpop.f32.mrb[0].mxu0
    %v712 = vadd.f32 %v615, %v711
    %713 = vdwg.mxu0
    %714 = vmatprep.subr.bf16.mxu0 0
    %715 = vmatpush1.bf16.msra.mxu0 %v539
    %716 = vmatprep.subr.bf16.mxu0 0
    %717 = vmatpush1.bf16.msra.mxu0 %v542
    %718 = vmatprep.subr.bf16.mxu0 0
    %719 = vmatpush1.bf16.msra.mxu0 %v545
    %720 = vmatprep.subr.bf16.mxu0 0
    %721 = vmatpush1.bf16.msra.mxu0 %v548
    %722 = vmatprep.subr.bf16.mxu0 0
    %723 = vmatpush1.bf16.msra.mxu0 %v551
    %724 = vmatprep.subr.bf16.mxu0 0
    %725 = vmatpush1.bf16.msra.mxu0 %v554
    %726 = vmatprep.subr.bf16.mxu0 0
    %727 = vmatpush1.bf16.msra.mxu0 %v557
    %728 = vmatprep.subr.bf16.mxu0 0
    %729 = vmatpush1.bf16.msra.mxu0 %v560
    %730 = vmatprep.subr.bf16.mxu0 0
    %731 = vmatpush1.bf16.msra.mxu0 0
    %732 = vmatprep.subr.bf16.mxu0 0
    %733 = vmatpush1.bf16.msra.mxu0 0
    %734 = vmatprep.subr.bf16.mxu0 0
    %735 = vmatpush1.bf16.msra.mxu0 0
    %736 = vmatprep.subr.bf16.mxu0 0
    %737 = vmatpush1.bf16.msra.mxu0 0
    %738 = vmatprep.subr.bf16.mxu0 0
    %739 = vmatpush1.bf16.msra.mxu0 0
    %740 = vmatprep.subr.bf16.mxu0 0
    %741 = vmatpush1.bf16.msra.mxu0 0
    %742 = vmatprep.subr.bf16.mxu0 0
    %743 = vmatpush1.bf16.msra.mxu0 0
    %744 = vmatprep.subr.bf16.mxu0 0
    %745 = vmatpush1.bf16.msra.mxu0 0
    %746 = vmatprep.mubr.bf16.mxu0 0
    %747 = vmatmul.mubr.bf16.gmra.mrb[0].mxu0 %v633
    %v748 = vpop.f32.mrb[0].mxu0
    %v749 = vadd.f32 %v580, %v748
    %v750 = vpop.f32.mrb[0].mxu0
    %v751 = vpop.f32.mrb[0].mxu0
    %v752 = vadd.f32 %v585, %v751
    %v753 = vpop.f32.mrb[0].mxu0
    %754 = vmatprep.mubr.bf16.mxu0 0
    %755 = vmatmul.mubr.bf16.gmra.mrb[0].mxu0 %v634
    %v756 = vpop.f32.mrb[0].mxu0
    %v757 = vadd.f32 %v590, %v756
    %v758 = vpop.f32.mrb[0].mxu0
    %v759 = vpop.f32.mrb[0].mxu0
    %v760 = vadd.f32 %v595, %v759
    %v761 = vpop.f32.mrb[0].mxu0
    %762 = vmatprep.mubr.bf16.mxu0 0
    %763 = vmatmul.mubr.bf16.gmra.mrb[0].mxu0 %v635
    %v764 = vpop.f32.mrb[0].mxu0
    %v765 = vadd.f32 %v600, %v764
    %v766 = vpop.f32.mrb[0].mxu0
    %v767 = vpop.f32.mrb[0].mxu0
    %v768 = vadd.f32 %v605, %v767
    %v769 = vpop.f32.mrb[0].mxu0
    %770 = vmatprep.mubr.bf16.mxu0 0
    %771 = vmatmul.mubr.bf16.gmra.mrb[0].mxu0 %v636
    %v772 = vpop.f32.mrb[0].mxu0
    %v773 = vadd.f32 %v610, %v772
    %v774 = vpop.f32.mrb[0].mxu0
    %v775 = vpop.f32.mrb[0].mxu0
    %v776 = vadd.f32 %v615, %v775
    %v777 = vpop.f32.mrb[0].mxu0
    %778 = vdwg.mxu0
    %v779 = vmax.f32 %v676, 0.0
    %v780 = vmax.f32 %v678, 0.0
    %v781 = vmax.f32 %v749, 0.0
    %v782 = vmax.f32 %v680, 0.0
    %v783 = vmax.f32 %v682, 0.0
    %v784 = vmax.f32 %v752, 0.0
    %v785 = vmax.f32 %v686, 0.0
    %v786 = vmax.f32 %v688, 0.0
    %v787 = vmax.f32 %v757, 0.0
    %v788 = vmax.f32 %v690, 0.0
    %v789 = vmax.f32 %v692, 0.0
    %v790 = vmax.f32 %v760, 0.0
    %v791 = vmax.f32 %v696, 0.0
    %v792 = vmax.f32 %v698, 0.0
    %v793 = vmax.f32 %v765, 0.0
    %v794 = vmax.f32 %v700, 0.0
    %v795 = vmax.f32 %v702, 0.0
    %v796 = vmax.f32 %v768, 0.0
    %v797 = vmax.f32 %v706, 0.0
    %v798 = vmax.f32 %v708, 0.0
    %v799 = vmax.f32 %v773, 0.0
    %v800 = vmax.f32 %v710, 0.0
    %v801 = vmax.f32 %v712, 0.0
    %v802 = vmax.f32 %v776, 0.0
    %v803 = vpack.c.bf16 %v782, %v779
    %v804 = vpack.c.bf16 %v783, %v780
    %v805 = vpack.c.bf16 %v784, %v781
    %v806 = vpack.c.bf16 %v788, %v785
    %v807 = vpack.c.bf16 %v789, %v786
    %v808 = vpack.c.bf16 %v790, %v787
    %v809 = vpack.c.bf16 %v794, %v791
    %v810 = vpack.c.bf16 %v795, %v792
    %v811 = vpack.c.bf16 %v796, %v793
    %v812 = vpack.c.bf16 %v800, %v797
    %v813 = vpack.c.bf16 %v801, %v798
    %v814 = vpack.c.bf16 %v802, %v799
    %v815 = vld [vmem:[%s5] sm:$0xf]
    %v816 = vld [vmem:[%s5 + $0x4] sm:$0xf]
    %v817 = vld [vmem:[%s5 + $0x8] sm:$0xf]
    %v818 = vld [vmem:[%s5 + $0xc] sm:$0x1]
    %v819 = vld [vmem:[#allocation7] sm:$0xff]
    %v820 = vld [vmem:[#allocation7 + $0x8] sm:$0xff]
    %v821 = vld [vmem:[#allocation7 + $0x10] sm:$0xff]
    %v822 = vld [vmem:[#allocation7 + $0x18] sm:$0x3]
    %824 = vset.pattern.permute.xlu0 0
    %825 = vperm.xlu0 %824, %v819
    %v826 = vpop.permute.xlu0 %825
    %829 = vset.pattern.permute.xlu0 0
    %830 = vperm.xlu0 %829, %v820
    %v831 = vpop.permute.xlu0 %830
    %834 = vset.pattern.permute.xlu0 0
    %835 = vperm.xlu0 %834, %v821
    %v836 = vpop.permute.xlu0 %835
    %839 = vset.pattern.permute.xlu0 0
    %840 = vperm.xlu0 %839, %v822
    %v841 = vpop.permute.xlu0 %840
    %v847 = vunpack.c.l.b16 %v815
    %v848 = vunpack.c.l.b16 %v816
    %v849 = vunpack.c.l.b16 %v817
    %v850 = vunpack.c.l.b16 %v818
    %v851 = vpack.c.b16 %v848, %v847
    %v852 = vpack.c.b16 %v850, %v849
    %vm853 = vcmask 523264
    %v855 = vsel %vm853, %v851, 0
    %v858 = vsel %vm853, %v852, 0
    %860 = vmatprep.subr.bf16.mxu0 %v804
    %861 = vmatpush1.bf16.msra.mxu0 %v803
    %862 = vmatprep.subr.bf16.mxu0 %v807
    %863 = vmatpush1.bf16.msra.mxu0 %v806
    %864 = vmatprep.subr.bf16.mxu0 %v810
    %865 = vmatpush1.bf16.msra.mxu0 %v809
    %866 = vmatprep.subr.bf16.mxu0 %v813
    %867 = vmatpush1.bf16.msra.mxu0 %v812
    %868 = vmatprep.subr.bf16.mxu0 0
    %869 = vmatpush1.bf16.msra.mxu0 0
    %870 = vmatprep.subr.bf16.mxu0 0
    %871 = vmatpush1.bf16.msra.mxu0 0
    %872 = vmatprep.subr.bf16.mxu0 0
    %873 = vmatpush1.bf16.msra.mxu0 0
    %874 = vmatprep.subr.bf16.mxu0 0
    %875 = vmatpush1.bf16.msra.mxu0 0
    %876 = vmatprep.subr.bf16.mxu0 0
    %877 = vmatpush1.bf16.msra.mxu0 0
    %878 = vmatprep.subr.bf16.mxu0 0
    %879 = vmatpush1.bf16.msra.mxu0 0
    %880 = vmatprep.subr.bf16.mxu0 0
    %881 = vmatpush1.bf16.msra.mxu0 0
    %882 = vmatprep.subr.bf16.mxu0 0
    %883 = vmatpush1.bf16.msra.mxu0 0
    %884 = vmatprep.subr.bf16.mxu0 0
    %885 = vmatpush1.bf16.msra.mxu0 0
    %886 = vmatprep.subr.bf16.mxu0 0
    %887 = vmatpush1.bf16.msra.mxu0 0
    %888 = vmatprep.subr.bf16.mxu0 0
    %889 = vmatpush1.bf16.msra.mxu0 0
    %890 = vmatprep.subr.bf16.mxu0 0
    %891 = vmatpush1.bf16.msra.mxu0 0
    %892 = vmatprep.mubr.bf16.mxu0 0
    %893 = vmatmul.mubr.bf16.gmra.mrb[0].mxu0 %v855
    %v894 = vpop.f32.mrb[0].mxu0
    %v895 = vadd.f32 %v826, %v894
    %v896 = vpop.f32.mrb[0].mxu0
    %v897 = vadd.f32 %v826, %v896
    %v898 = vpop.f32.mrb[0].mxu0
    %v899 = vadd.f32 %v831, %v898
    %v900 = vpop.f32.mrb[0].mxu0
    %v901 = vadd.f32 %v831, %v900
    %902 = vmatprep.mubr.bf16.mxu0 0
    %903 = vmatmul.mubr.bf16.gmra.mrb[0].mxu0 %v858
    %v904 = vpop.f32.mrb[0].mxu0
    %v905 = vadd.f32 %v836, %v904
    %v906 = vpop.f32.mrb[0].mxu0
    %v907 = vadd.f32 %v836, %v906
    %v908 = vpop.f32.mrb[0].mxu0
    %v909 = vadd.f32 %v841, %v908
    %v910 = vpop.f32.mrb[0].mxu0
    %v911 = vadd.f32 %v841, %v910
    %912 = vdwg.mxu0
    %913 = vmatprep.subr.bf16.mxu0 0
    %914 = vmatpush1.bf16.msra.mxu0 %v805
    %915 = vmatprep.subr.bf16.mxu0 0
    %916 = vmatpush1.bf16.msra.mxu0 %v808
    %917 = vmatprep.subr.bf16.mxu0 0
    %918 = vmatpush1.bf16.msra.mxu0 %v811
    %919 = vmatprep.subr.bf16.mxu0 0
    %920 = vmatpush1.bf16.msra.mxu0 %v814
    %921 = vmatprep.subr.bf16.mxu0 0
    %922 = vmatpush1.bf16.msra.mxu0 0
    %923 = vmatprep.subr.bf16.mxu0 0
    %924 = vmatpush1.bf16.msra.mxu0 0
    %925 = vmatprep.subr.bf16.mxu0 0
    %926 = vmatpush1.bf16.msra.mxu0 0
    %927 = vmatprep.subr.bf16.mxu0 0
    %928 = vmatpush1.bf16.msra.mxu0 0
    %929 = vmatprep.subr.bf16.mxu0 0
    %930 = vmatpush1.bf16.msra.mxu0 0
    %931 = vmatprep.subr.bf16.mxu0 0
    %932 = vmatpush1.bf16.msra.mxu0 0
    %933 = vmatprep.subr.bf16.mxu0 0
    %934 = vmatpush1.bf16.msra.mxu0 0
    %935 = vmatprep.subr.bf16.mxu0 0
    %936 = vmatpush1.bf16.msra.mxu0 0
    %937 = vmatprep.subr.bf16.mxu0 0
    %938 = vmatpush1.bf16.msra.mxu0 0
    %939 = vmatprep.subr.bf16.mxu0 0
    %940 = vmatpush1.bf16.msra.mxu0 0
    %941 = vmatprep.subr.bf16.mxu0 0
    %942 = vmatpush1.bf16.msra.mxu0 0
    %943 = vmatprep.subr.bf16.mxu0 0
    %944 = vmatpush1.bf16.msra.mxu0 0
    %945 = vmatprep.mubr.bf16.mxu0 0
    %946 = vmatmul.mubr.bf16.gmra.mrb[0].mxu0 %v855
    %v947 = vpop.f32.mrb[0].mxu0
    %v948 = vadd.f32 %v826, %v947
    %v949 = vpop.f32.mrb[0].mxu0
    %v950 = vpop.f32.mrb[0].mxu0
    %v951 = vadd.f32 %v831, %v950
    %v952 = vpop.f32.mrb[0].mxu0
    %953 = vmatprep.mubr.bf16.mxu0 0
    %954 = vmatmul.mubr.bf16.gmra.mrb[0].mxu0 %v858
    %v955 = vpop.f32.mrb[0].mxu0
    %v956 = vadd.f32 %v836, %v955
    %v957 = vpop.f32.mrb[0].mxu0
    %v958 = vpop.f32.mrb[0].mxu0
    %v959 = vadd.f32 %v841, %v958
    %v960 = vpop.f32.mrb[0].mxu0
    %961 = vdwg.mxu0
    %v962 = vpack.c.bf16 %v899, %v895
    %v963 = vpack.c.bf16 %v901, %v897
    %v964 = vpack.c.bf16 %v951, %v948
    %v965 = vpack.c.bf16 %v909, %v905
    %v966 = vpack.c.bf16 %v911, %v907
    %v967 = vpack.c.bf16 %v959, %v956
    %v974 = vunpack.c.l.b16 %v962
    %v975 = vunpack.c.l.b16 %v963
    %v976 = vunpack.c.l.b16 %v964
    %v977 = vunpack.c.h.b16 %v962
    %v978 = vunpack.c.h.b16 %v963
    %v979 = vunpack.c.h.b16 %v964
    %v980 = vunpack.c.l.b16 %v965
    %v981 = vunpack.c.l.b16 %v966
    %v982 = vunpack.c.l.b16 %v967
    %v983 = vunpack.c.h.b16 %v965
    %v984 = vunpack.c.h.b16 %v966
    %v985 = vunpack.c.h.b16 %v967
    %v986 = vpack.c.b16 %v975, %v974
    %v987 = vpack.c.b16 %v976, %v976
    %v988 = vpack.c.b16 %v978, %v977
    %v989 = vpack.c.b16 %v979, %v979
    %v990 = vpack.c.b16 %v981, %v980
    %v991 = vpack.c.b16 %v982, %v982
    %v992 = vpack.c.b16 %v984, %v983
    %v993 = vpack.c.b16 %v985, %v985
    %1002 = vst [vmem:[%s7] sm:$0xff] %v986
    %1003 = vst [vmem:[%s7 + $0x8] sm:$0xf] %v987
    %1004 = vst [vmem:[%s7 + $0xc] sm:$0xff] %v988
    %1005 = vst [vmem:[%s7 + $0x14] sm:$0xf] %v989
    %1006 = vst [vmem:[%s7 + $0x18] sm:$0xff] %v990
    %1007 = vst [vmem:[%s7 + $0x20] sm:$0xf] %v991
    %1008 = vst [vmem:[%s7 + $0x24] sm:$0x11] %v992
    %1009 = vst [vmem:[%s7 + $0x2c] sm:$0x1] %v993
    // Predicated region
    $region46: #{_lambda_.1} parent=1 // pred_check
      _
    $region47: #{_lambda_.1} parent=1 // pred_check_branch
      %1011 = sbr.rel (0) target = $region49
    $region48: #{_lambda_.1} parent=1 // pred_region
      _
    $region49: #{_lambda_.1} parent=1 // pred_fallthru
      _
    // Predicated region
    $region50: #{_lambda_.1} parent=1 // pred_check
      _
    $region51: #{_lambda_.1} parent=1 // pred_check_branch
      %1013 = sbr.rel (0) target = $region53
    $region52: #{_lambda_.1} parent=1 // pred_region
      _
    $region53: #{_lambda_.1} parent=1 // pred_fallthru
      _
    %1014 = vsyncpa [#allocation3], 1
    %1015 = vsyncpa [#allocation5], 1
    %1016 = vsyncpa [#allocation8], 1

</llo_original>
